<compile_context>
chip_gen: v6e
topology: v6e:2x2x1
jax: 0.10.0
libtpu: 0.0.40
codegen_flags: <defaults>
</compile_context>

<pallas_src>
import jax
import jax.numpy as jnp
from jax.experimental import pallas as pl
from jax.experimental.pallas import tpu as pltpu


def _round_up(n, m):
    return ((n + m - 1) // m) * m


def _autoenc_kernel(x_ref,
                    w1_ref, b1_ref,     # enc Linear(40->20)
                    w23_ref, b23_ref,   # fused enc-L2 @ dec-L1 (20->20)
                    w4_ref, b4_ref,     # dec Linear(20->40)
                    o_ref):
    # MXU matmuls with f32 accumulation; bias-add / ReLU stay f32 on the VPU.
    # x is cast to the weight (compute) dtype in-register, not in HBM.
    xw = x_ref[...].astype(w1_ref.dtype)
    h = jnp.dot(xw, w1_ref[...], preferred_element_type=jnp.float32) + b1_ref[...]
    h = jnp.maximum(h, 0.0)
    h = jnp.dot(h.astype(w23_ref.dtype), w23_ref[...],
                preferred_element_type=jnp.float32) + b23_ref[...]
    h = jnp.maximum(h, 0.0)
    h = jnp.dot(h.astype(w4_ref.dtype), w4_ref[...],
                preferred_element_type=jnp.float32) + b4_ref[...]
    o_ref[...] = h.astype(o_ref.dtype)


def prepare_params(params, compute_dtype=jnp.bfloat16):
    """Hoist the (enc-L2 @ dec-L1) fusion and dtype casts out of the hot path.

    params: [(W1,b1),(W2,b2),(W3,b3),(W4,b4)] with W stored as (in, out)
            (i.e. torch weight transposed); biases may be 1-D (torch) or (1,N).
    Returns a flat 6-tuple consumed by linear_autoencoder_forward.
    """
    def norm(w, b):
        return (jnp.asarray(w, jnp.float32),
                jnp.asarray(b, jnp.float32).reshape(1, -1))

    (w1, b1), (w2, b2), (w3, b3), (w4, b4) = [norm(w, b) for w, b in params]
    # Valid because the module applies no activation between enc L2 and dec L1.
    w23 = w2 @ w3                       # (20, 20)
    b23 = b2 @ w3 + b3                  # (1, 20)
    cd = compute_dtype
    # Biases stay f32 (bias-add / ReLU are done in f32 on the VPU).
    return (w1.astype(cd), b1, w23.astype(cd), b23, w4.astype(cd), b4)


def linear_autoencoder_forward(x, params, *, tile_b=None,
                               compute_dtype=jnp.bfloat16, out_dtype=None):
    """Forward pass of MyLinearAutoencoder.

    params: raw [(W, b)] * 4 (W as (in, out) = torch W.T) OR the 6-tuple from
            prepare_params() (preferred for repeated calls under jit).
    compute_dtype: MXU weight/input dtype. Accumulation stays f32 in-kernel.
    out_dtype: output dtype; defaults to compute_dtype (pass jnp.float32 to
               match the PyTorch module's output dtype exactly).
    """
    if len(params) == 4:
        params = prepare_params(params, compute_dtype=compute_dtype)
    w1, b1, w23, b23, w4, b4 = params
    if out_dtype is None:
        out_dtype = w1.dtype

    B, in_dim = x.shape
    out_dim = w4.shape[1]

    # ---- batch-tile selection --------------------------------------------
    # bf16 prefers sublane multiples of 16; the hard Pallas constraint is 8.
    gran = 16 if jnp.dtype(w1.dtype).itemsize <= 2 else 8
    # Lane-padded (.,40)->(.,128) VMEM cost of one x block + one out block.
    bytes_per_row = 128 * (jnp.dtype(x.dtype).itemsize
                           + jnp.dtype(out_dtype).itemsize)
    vmem_budget = 24 << 20              # double-buffered x+out budget (v7x-safe)
    cap = max(gran, (vmem_budget // (2 * bytes_per_row)) // gran * gran)
    if tile_b is None:
        # >=4 grid steps keeps both v7x TensorCores fed and the pipeline busy,
        # while the cap keeps per-step DMA large enough to amortize overhead.
        tile_b = min(cap, _round_up(pl.cdiv(B, 4), gran))
    tile_b = max(8, (tile_b // 8) * 8)
    tile_b = min(tile_b, _round_up(B, 8))
    grid = (pl.cdiv(B, tile_b),)        # no padding: last block is masked

    # Explicit scoped-VMEM limit so large tiles aren't rejected by the
    # 16/32 MiB defaults; kept well under v7x's 64 MiB physical VMEM.
    vmem_need = 2 * tile_b * bytes_per_row          # double-buffered x + out
    vmem_limit = int(min(max(vmem_need + (8 << 20), 32 << 20), 48 << 20))

    x_spec = pl.BlockSpec((tile_b, in_dim), lambda i: (i, 0))
    out_spec = pl.BlockSpec((tile_b, out_dim), lambda i: (i, 0))

    def resident(arr):
        # Constant block index -> fetched once, VMEM-resident across the grid.
        return pl.BlockSpec(arr.shape, lambda i: (0, 0))

    return pl.pallas_call(
        _autoenc_kernel,
        out_shape=jax.ShapeDtypeStruct((B, out_dim), out_dtype),
        grid=grid,
        in_specs=[x_spec,
                  resident(w1), resident(b1),
                  resident(w23), resident(b23),
                  resident(w4), resident(b4)],
        out_specs=out_spec,
        compiler_params=pltpu.CompilerParams(
            dimension_semantics=("parallel",),
            vmem_limit_bytes=vmem_limit),
    )(x, w1, b1, w23, b23, w4, b4)


def _init_linear(key, in_dim, out_dim, dtype=jnp.float32):
    # Mimic torch.nn.Linear default init: U(-1/sqrt(fan_in), 1/sqrt(fan_in)).
    kw, kb = jax.random.split(key)
    bound = 1.0 / (in_dim ** 0.5)
    # Stored as (in, out) so the kernel does x @ W (== x @ W_torch.T).
    w = jax.random.uniform(kw, (in_dim, out_dim), dtype, -bound, bound)
    b = jax.random.uniform(kb, (out_dim,), dtype, -bound, bound)  # torch-style 1-D
    return w, b


def _reference_forward(x, params):
    # Unfused f32 reference -- exact semantics of the PyTorch module.
    (w1, b1), (w2, b2), (w3, b3), (w4, b4) = params
    h = jnp.maximum(x @ w1 + b1, 0.0)
    h = h @ w2 + b2
    h = jnp.maximum(h @ w3 + b3, 0.0)
    return h @ w4 + b4


if __name__ == "__main__":
    key = jax.random.PRNGKey(0)
    kx, kx2, k1, k2, k3, k4 = jax.random.split(key, 6)

    B, IN = 8, 40
    x = jax.random.normal(kx, (B, IN), jnp.float32)

    params = [
        _init_linear(k1, 40, 20),  # encoder layer 1
        _init_linear(k2, 20, 10),  # encoder layer 2
        _init_linear(k3, 10, 20),  # decoder layer 1
        _init_linear(k4, 20, 40),  # decoder layer 2
    ]
    ref = _reference_forward(x, params)

    # f32 path: tight check vs. unfused reference (fusion only adds fp rounding).
    out_f32 = jax.block_until_ready(
        linear_autoencoder_forward(x, params, compute_dtype=jnp.float32))
    assert out_f32.shape == (B, IN), out_f32.shape
    assert out_f32.dtype == jnp.float32
    assert jnp.allclose(out_f32, ref, atol=1e-3, rtol=1e-3), "f32 mismatch vs reference"

    # Default path (bf16 weights/output, f32 accumulation), pre-fused params.
    prepared = prepare_params(params)
    out_bf16 = jax.block_until_ready(linear_autoencoder_forward(x, prepared))
    assert out_bf16.shape == (B, IN), out_bf16.shape
    assert out_bf16.dtype == jnp.bfloat16
    o = out_bf16.astype(jnp.float32)
    assert bool(jnp.all(jnp.isfinite(o)))
    assert jnp.allclose(o, ref, atol=0.2, rtol=0.2), "bf16 path diverged"

    # Non-divisible batch (no-pad masked last block) path.
    B2 = 37
    x2 = jax.random.normal(kx2, (B2, IN), jnp.float32)
    out2 = jax.block_until_ready(
        linear_autoencoder_forward(x2, params, compute_dtype=jnp.float32))
    assert out2.shape == (B2, IN), out2.shape
    assert jnp.allclose(out2, _reference_forward(x2, params), atol=1e-3, rtol=1e-3), \
        "ragged-batch mismatch vs reference"

    print("KERNEL_OK")
</pallas_src>

<mosaic_0001>
module attributes {stable_mosaic.version = 11 : i64} {
  func.func @_autoenc_kernel(%arg0: i32, %arg1: memref<8x40xf32, #tpu.memory_space<vmem>>, %arg2: memref<40x20xf32, #tpu.memory_space<vmem>>, %arg3: memref<1x20xf32, #tpu.memory_space<vmem>>, %arg4: memref<20x20xf32, #tpu.memory_space<vmem>>, %arg5: memref<1x20xf32, #tpu.memory_space<vmem>>, %arg6: memref<20x40xf32, #tpu.memory_space<vmem>>, %arg7: memref<1x40xf32, #tpu.memory_space<vmem>>, %arg8: memref<8x40xf32, #tpu.memory_space<vmem>>) attributes {dimension_semantics = [#tpu.dimension_semantics<parallel>], iteration_bounds = array<i64: 1>, scalar_prefetch = 0 : i64, scratch_operands = 0 : i64, tpu.core_type = #tpu.core_type<tc>, window_params = [{transform_indices = @transform_0, window_bounds = array<i64: 8, 40>}, {pipeline_mode = #tpu.pipeline_mode<synchronous>, transform_indices = @transform_1, window_bounds = array<i64: 40, 20>}, {pipeline_mode = #tpu.pipeline_mode<synchronous>, transform_indices = @transform_2, window_bounds = array<i64: 1, 20>}, {pipeline_mode = #tpu.pipeline_mode<synchronous>, transform_indices = @transform_3, window_bounds = array<i64: 20, 20>}, {pipeline_mode = #tpu.pipeline_mode<synchronous>, transform_indices = @transform_4, window_bounds = array<i64: 1, 20>}, {pipeline_mode = #tpu.pipeline_mode<synchronous>, transform_indices = @transform_5, window_bounds = array<i64: 20, 40>}, {pipeline_mode = #tpu.pipeline_mode<synchronous>, transform_indices = @transform_6, window_bounds = array<i64: 1, 40>}, {transform_indices = @transform_7, window_bounds = array<i64: 8, 40>}]} {
    %c0 = arith.constant 0 : index
    %c0_0 = arith.constant 0 : index
    %0 = vector.load %arg1[%c0, %c0_0] : memref<8x40xf32, #tpu.memory_space<vmem>>, vector<8x40xf32>
    %c0_1 = arith.constant 0 : index
    %c0_2 = arith.constant 0 : index
    %1 = vector.load %arg2[%c0_1, %c0_2] : memref<40x20xf32, #tpu.memory_space<vmem>>, vector<40x20xf32>
    %cst = arith.constant dense<0.000000e+00> : vector<8x20xf32>
    %2 = tpu.matmul %0, %1, %cst {dimension_numbers = #tpu.dot_dimension_numbers<[1], [0], [0], [1], [0, 0, 1, 1], [], []>} : vector<8x40xf32>, vector<40x20xf32>, vector<8x20xf32> -> vector<8x20xf32>
    %c0_3 = arith.constant 0 : index
    %c0_4 = arith.constant 0 : index
    %3 = vector.load %arg3[%c0_3, %c0_4] : memref<1x20xf32, #tpu.memory_space<vmem>>, vector<1x20xf32>
    %4 = vector.broadcast %3 : vector<1x20xf32> to vector<8x20xf32>
    %5 = arith.addf %2, %4 : vector<8x20xf32>
    %cst_5 = arith.constant 0.000000e+00 : f32
    %6 = vector.broadcast %cst_5 : f32 to vector<8x20xf32>
    %7 = arith.maximumf %5, %6 : vector<8x20xf32>
    %c0_6 = arith.constant 0 : index
    %c0_7 = arith.constant 0 : index
    %8 = vector.load %arg4[%c0_6, %c0_7] : memref<20x20xf32, #tpu.memory_space<vmem>>, vector<20x20xf32>
    %cst_8 = arith.constant dense<0.000000e+00> : vector<8x20xf32>
    %9 = tpu.matmul %7, %8, %cst_8 {dimension_numbers = #tpu.dot_dimension_numbers<[1], [0], [0], [1], [0, 0, 1, 1], [], []>} : vector<8x20xf32>, vector<20x20xf32>, vector<8x20xf32> -> vector<8x20xf32>
    %c0_9 = arith.constant 0 : index
    %c0_10 = arith.constant 0 : index
    %10 = vector.load %arg5[%c0_9, %c0_10] : memref<1x20xf32, #tpu.memory_space<vmem>>, vector<1x20xf32>
    %11 = vector.broadcast %10 : vector<1x20xf32> to vector<8x20xf32>
    %12 = arith.addf %9, %11 : vector<8x20xf32>
    %cst_11 = arith.constant 0.000000e+00 : f32
    %13 = vector.broadcast %cst_11 : f32 to vector<8x20xf32>
    %14 = arith.maximumf %12, %13 : vector<8x20xf32>
    %c0_12 = arith.constant 0 : index
    %c0_13 = arith.constant 0 : index
    %15 = vector.load %arg6[%c0_12, %c0_13] : memref<20x40xf32, #tpu.memory_space<vmem>>, vector<20x40xf32>
    %cst_14 = arith.constant dense<0.000000e+00> : vector<8x40xf32>
    %16 = tpu.matmul %14, %15, %cst_14 {dimension_numbers = #tpu.dot_dimension_numbers<[1], [0], [0], [1], [0, 0, 1, 1], [], []>} : vector<8x20xf32>, vector<20x40xf32>, vector<8x40xf32> -> vector<8x40xf32>
    %c0_15 = arith.constant 0 : index
    %c0_16 = arith.constant 0 : index
    %17 = vector.load %arg7[%c0_15, %c0_16] : memref<1x40xf32, #tpu.memory_space<vmem>>, vector<1x40xf32>
    %18 = vector.broadcast %17 : vector<1x40xf32> to vector<8x40xf32>
    %19 = arith.addf %16, %18 : vector<8x40xf32>
    %c0_17 = arith.constant 0 : index
    %c0_18 = arith.constant 0 : index
    %20 = vector.load %arg8[%c0_17, %c0_18] : memref<8x40xf32, #tpu.memory_space<vmem>>, vector<8x40xf32>
    tpu.vector_store %arg8[%c0_17, %c0_18], %19 {strides = array<i32>} : memref<8x40xf32, #tpu.memory_space<vmem>>, vector<8x40xf32>,
    return
  }
  func.func @transform_0(%arg0: i32) -> (i32, i32) {
    %c0_i32 = arith.constant 0 : i32
    %c0_i32_0 = arith.constant 0 : i32
    return %arg0, %c0_i32 : i32, i32
  }
  func.func @transform_1(%arg0: i32) -> (i32, i32) {
    %c0_i32 = arith.constant 0 : i32
    %c0_i32_0 = arith.constant 0 : i32
    %c0_i32_1 = arith.constant 0 : i32
    return %c0_i32, %c0_i32_0 : i32, i32
  }
  func.func @transform_2(%arg0: i32) -> (i32, i32) {
    %c0_i32 = arith.constant 0 : i32
    %c0_i32_0 = arith.constant 0 : i32
    %c0_i32_1 = arith.constant 0 : i32
    return %c0_i32, %c0_i32_0 : i32, i32
  }
  func.func @transform_3(%arg0: i32) -> (i32, i32) {
    %c0_i32 = arith.constant 0 : i32
    %c0_i32_0 = arith.constant 0 : i32
    %c0_i32_1 = arith.constant 0 : i32
    return %c0_i32, %c0_i32_0 : i32, i32
  }
  func.func @transform_4(%arg0: i32) -> (i32, i32) {
    %c0_i32 = arith.constant 0 : i32
    %c0_i32_0 = arith.constant 0 : i32
    %c0_i32_1 = arith.constant 0 : i32
    return %c0_i32, %c0_i32_0 : i32, i32
  }
  func.func @transform_5(%arg0: i32) -> (i32, i32) {
    %c0_i32 = arith.constant 0 : i32
    %c0_i32_0 = arith.constant 0 : i32
    %c0_i32_1 = arith.constant 0 : i32
    return %c0_i32, %c0_i32_0 : i32, i32
  }
  func.func @transform_6(%arg0: i32) -> (i32, i32) {
    %c0_i32 = arith.constant 0 : i32
    %c0_i32_0 = arith.constant 0 : i32
    %c0_i32_1 = arith.constant 0 : i32
    return %c0_i32, %c0_i32_0 : i32, i32
  }
  func.func @transform_7(%arg0: i32) -> (i32, i32) {
    %c0_i32 = arith.constant 0 : i32
    %c0_i32_0 = arith.constant 0 : i32
    return %arg0, %c0_i32 : i32, i32
  }
}

</mosaic_0001>

<llo_original>
// kernel: tpu_custom_call.1
$region0: #{tpu_custom_call.1}
  #allocation0 [shape = 'u32[]', space=smem, size = 0x4, offset = 0x4, fixed_abs, tag = 'smem constant byte address 0x4 - core index']
  #allocation1 [shape = 'u32[144,128]{1,0:T(1,128)}', space=vmem, size = 0x12000, scoped, tag = 'internal scratch']
  %s0 = inlined_call_operand.vmem [shape: f32[8,40], index: 0, kind: input, shape index: {}]
  %s1 = inlined_call_operand.vmem [shape: f32[40,20], index: 1, kind: input, shape index: {}]
  %s2 = inlined_call_operand.vmem [shape: f32[1,20], index: 2, kind: input, shape index: {}]
  %s3 = inlined_call_operand.vmem [shape: f32[20,20], index: 3, kind: input, shape index: {}]
  %s4 = inlined_call_operand.vmem [shape: f32[1,20], index: 4, kind: input, shape index: {}]
  %s5 = inlined_call_operand.vmem [shape: f32[20,40], index: 5, kind: input, shape index: {}]
  %s6 = inlined_call_operand.vmem [shape: f32[1,40], index: 6, kind: input, shape index: {}]
  %s7 = inlined_call_operand.hbm [shape: f32[8,40], index: 7, kind: output, shape index: {}]
  %s8 = sld [smem:[#allocation0]]
  $region38: #{tpu_custom_call.1} parent=0
    _
  %s10 = ssub.s32 1, %s8
  %s11 = scalar_select 0, %s10, %s8
  $region1: #{tpu_custom_call.1} parent=0
    #allocation2 [shape = 'u8[4096]{0}', space=vmem, size = 0x1000, scoped, tag = 'output window, operand 0, single buffered']
    #allocation3 [shape = 's32[1]{0}', space=sflag, size = 0x4, scoped, tag = 'scoped memory for tpu_custom_call.1']
    %12 = vsyncpa [#allocation3], 0
    // Predicated region
    $region2: #{tpu_custom_call.1} parent=1 // pred_check
      _
    $region3: #{tpu_custom_call.1} parent=1 // pred_check_branch
      %14 = sbr.rel (0) target = $region5
    $region4: #{tpu_custom_call.1} parent=1 // pred_region
      _
    $region5: #{tpu_custom_call.1} parent=1 // pred_fallthru
      _
    // Predicated region
    $region6: #{tpu_custom_call.1} parent=1 // pred_check
      _
    $region7: #{tpu_custom_call.1} parent=1 // pred_check_branch
      %16 = sbr.rel (0) target = $region9
    $region8: #{tpu_custom_call.1} parent=1 // pred_region
      _
    $region9: #{tpu_custom_call.1} parent=1 // pred_fallthru
      _
    // Predicated region
    $region10: #{tpu_custom_call.1} parent=1 // pred_check
      _
    $region11: #{tpu_custom_call.1} parent=1 // pred_check_branch
      %18 = sbr.rel (0) target = $region13
    $region12: #{tpu_custom_call.1} parent=1 // pred_region
      _
    $region13: #{tpu_custom_call.1} parent=1 // pred_fallthru
      _
    // Predicated region
    $region14: #{tpu_custom_call.1} parent=1 // pred_check
      _
    $region15: #{tpu_custom_call.1} parent=1 // pred_check_branch
      %20 = sbr.rel (0) target = $region17
    $region16: #{tpu_custom_call.1} parent=1 // pred_region
      _
    $region17: #{tpu_custom_call.1} parent=1 // pred_fallthru
      _
    // Predicated region
    $region18: #{tpu_custom_call.1} parent=1 // pred_check
      _
    $region19: #{tpu_custom_call.1} parent=1 // pred_check_branch
      %22 = sbr.rel (0) target = $region21
    $region20: #{tpu_custom_call.1} parent=1 // pred_region
      _
    $region21: #{tpu_custom_call.1} parent=1 // pred_fallthru
      _
    // Predicated region
    $region22: #{tpu_custom_call.1} parent=1 // pred_check
      _
    $region23: #{tpu_custom_call.1} parent=1 // pred_check_branch
      %24 = sbr.rel (0) target = $region25
    $region24: #{tpu_custom_call.1} parent=1 // pred_region
      _
    $region25: #{tpu_custom_call.1} parent=1 // pred_fallthru
      _
    // Predicated region
    $region26: #{tpu_custom_call.1} parent=1 // pred_check
      _
    $region27: #{tpu_custom_call.1} parent=1 // pred_check_branch
      %26 = sbr.rel (0) target = $region29
    $region28: #{tpu_custom_call.1} parent=1 // pred_region
      _
    $region29: #{tpu_custom_call.1} parent=1 // pred_fallthru
      _
    %v27 = vld [vmem:[%s0] sm:$0xff]
    %v28 = vld [vmem:[%s1] sm:$0xff]
    %v29 = vld [vmem:[%s1 + $0x8] sm:$0xff]
    %v30 = vld [vmem:[%s1 + $0x10] sm:$0xff]
    %v31 = vld [vmem:[%s1 + $0x18] sm:$0xff]
    %v32 = vld [vmem:[%s1 + $0x20] sm:$0xff]
    %v33 = vld [vmem:[%s2] sm:$0x1]
    %v35 = vlaneseq
    %v36 = vshrl.u32 %v35, 7
    %v37 = vsub.s32 0, %v36
    %v38 = vrot.slane %v33, %v37
    %vm40 = vcmask 326656
    %v42 = vsel %vm40, %v27, 0
    %44 = vmatprep.subr.mxu0 0.0
    %45 = vmatpush1.msra.mxu0 0.0
    %46 = vmatprep.subr.mxu0 0.0
    %47 = vmatpush1.msra.mxu0 0.0
    %48 = vmatprep.subr.mxu0 0.0
    %49 = vmatpush1.msra.mxu0 0.0
    %50 = vmatprep.subr.mxu0 0.0
    %51 = vmatpush1.msra.mxu0 0.0
    %52 = vmatprep.subr.mxu0 0.0
    %53 = vmatpush1.msra.mxu0 0.0
    %54 = vmatprep.subr.mxu0 0.0
    %55 = vmatpush1.msra.mxu0 0.0
    %56 = vmatprep.subr.mxu0 0.0
    %57 = vmatpush1.msra.mxu0 0.0
    %58 = vmatprep.subr.mxu0 0.0
    %59 = vmatpush1.msra.mxu0 0.0
    %60 = vmatprep.subr.mxu0 0.0
    %61 = vmatpush1.msra.mxu0 0.0
    %62 = vmatprep.subr.mxu0 0.0
    %63 = vmatpush1.msra.mxu0 0.0
    %64 = vmatprep.subr.mxu0 0.0
    %65 = vmatpush1.msra.mxu0 0.0
    %66 = vmatprep.subr.mxu0 0.0
    %67 = vmatpush1.msra.mxu0 %v32
    %68 = vmatprep.subr.mxu0 0.0
    %69 = vmatpush1.msra.mxu0 %v31
    %70 = vmatprep.subr.mxu0 0.0
    %71 = vmatpush1.msra.mxu0 %v30
    %72 = vmatprep.subr.mxu0 0.0
    %73 = vmatpush1.msra.mxu0 %v29
    %74 = vmatprep.subr.mxu0 0.0
    %75 = vmatpush1.msra.mxu0 %v28
    %76 = vmatprep.subr.mxu0 0.0
    %77 = vmatpush2.msra.mxu0 0.0
    %78 = vmatprep.subr.mxu0 0.0
    %79 = vmatpush2.msra.mxu0 0.0
    %80 = vmatprep.subr.mxu0 0.0
    %81 = vmatpush2.msra.mxu0 0.0
    %82 = vmatprep.subr.mxu0 0.0
    %83 = vmatpush2.msra.mxu0 0.0
    %84 = vmatprep.subr.mxu0 0.0
    %85 = vmatpush2.msra.mxu0 0.0
    %86 = vmatprep.subr.mxu0 0.0
    %87 = vmatpush2.msra.mxu0 0.0
    %88 = vmatprep.subr.mxu0 0.0
    %89 = vmatpush2.msra.mxu0 0.0
    %90 = vmatprep.subr.mxu0 0.0
    %91 = vmatpush2.msra.mxu0 0.0
    %92 = vmatprep.subr.mxu0 0.0
    %93 = vmatpush2.msra.mxu0 0.0
    %94 = vmatprep.subr.mxu0 0.0
    %95 = vmatpush2.msra.mxu0 0.0
    %96 = vmatprep.subr.mxu0 0.0
    %97 = vmatpush2.msra.mxu0 0.0
    %98 = vmatprep.subr.mxu0 0.0
    %99 = vmatpush2.msra.mxu0 0.0
    %100 = vmatprep.subr.mxu0 0.0
    %101 = vmatpush2.msra.mxu0 0.0
    %102 = vmatprep.subr.mxu0 0.0
    %103 = vmatpush2.msra.mxu0 0.0
    %104 = vmatprep.subr.mxu0 0.0
    %105 = vmatpush2.msra.mxu0 0.0
    %106 = vmatprep.subr.mxu0 0.0
    %107 = vmatpush2.msra.mxu0 0.0
    %108 = vmatprep.mubr.f32.mxu0 0.0
    %109 = vmatmul.mubr.f32.gmra.mxu0 %v42
    %v110 = vpop.f32.mrf.mxu0
    %v111 = vadd.f32 %v38, %v110
    %v112 = vpop.f32.mrf.mxu0
    %113 = vdwg.mxu0
    %v114 = vmax.f32 %v111, 0.0
    %v115 = vld [vmem:[%s3] sm:$0xff]
    %v116 = vld [vmem:[%s3 + $0x8] sm:$0xff]
    %v117 = vld [vmem:[%s3 + $0x10] sm:$0xf]
    %v118 = vld [vmem:[%s4] sm:$0x1]
    %v120 = vlaneseq
    %v121 = vshrl.u32 %v120, 7
    %v122 = vsub.s32 0, %v121
    %v123 = vrot.slane %v118, %v122
    %vm125 = vcmask 162816
    %v127 = vsel %vm125, %v114, 0
    %vm129 = vcmask 1043456
    %v131 = vsel %vm129, %v117, 0
    %133 = vmatprep.subr.mxu0 0.0
    %134 = vmatpush1.msra.mxu0 0.0
    %135 = vmatprep.subr.mxu0 0.0
    %136 = vmatpush1.msra.mxu0 0.0
    %137 = vmatprep.subr.mxu0 0.0
    %138 = vmatpush1.msra.mxu0 0.0
    %139 = vmatprep.subr.mxu0 0.0
    %140 = vmatpush1.msra.mxu0 0.0
    %141 = vmatprep.subr.mxu0 0.0
    %142 = vmatpush1.msra.mxu0 0.0
    %143 = vmatprep.subr.mxu0 0.0
    %144 = vmatpush1.msra.mxu0 0.0
    %145 = vmatprep.subr.mxu0 0.0
    %146 = vmatpush1.msra.mxu0 0.0
    %147 = vmatprep.subr.mxu0 0.0
    %148 = vmatpush1.msra.mxu0 0.0
    %149 = vmatprep.subr.mxu0 0.0
    %150 = vmatpush1.msra.mxu0 0.0
    %151 = vmatprep.subr.mxu0 0.0
    %152 = vmatpush1.msra.mxu0 0.0
    %153 = vmatprep.subr.mxu0 0.0
    %154 = vmatpush1.msra.mxu0 0.0
    %155 = vmatprep.subr.mxu0 0.0
    %156 = vmatpush1.msra.mxu0 0.0
    %157 = vmatprep.subr.mxu0 0.0
    %158 = vmatpush1.msra.mxu0 0.0
    %159 = vmatprep.subr.mxu0 0.0
    %160 = vmatpush1.msra.mxu0 %v131
    %161 = vmatprep.subr.mxu0 0.0
    %162 = vmatpush1.msra.mxu0 %v116
    %163 = vmatprep.subr.mxu0 0.0
    %164 = vmatpush1.msra.mxu0 %v115
    %165 = vmatprep.subr.mxu0 0.0
    %166 = vmatpush2.msra.mxu0 0.0
    %167 = vmatprep.subr.mxu0 0.0
    %168 = vmatpush2.msra.mxu0 0.0
    %169 = vmatprep.subr.mxu0 0.0
    %170 = vmatpush2.msra.mxu0 0.0
    %171 = vmatprep.subr.mxu0 0.0
    %172 = vmatpush2.msra.mxu0 0.0
    %173 = vmatprep.subr.mxu0 0.0
    %174 = vmatpush2.msra.mxu0 0.0
    %175 = vmatprep.subr.mxu0 0.0
    %176 = vmatpush2.msra.mxu0 0.0
    %177 = vmatprep.subr.mxu0 0.0
    %178 = vmatpush2.msra.mxu0 0.0
    %179 = vmatprep.subr.mxu0 0.0
    %180 = vmatpush2.msra.mxu0 0.0
    %181 = vmatprep.subr.mxu0 0.0
    %182 = vmatpush2.msra.mxu0 0.0
    %183 = vmatprep.subr.mxu0 0.0
    %184 = vmatpush2.msra.mxu0 0.0
    %185 = vmatprep.subr.mxu0 0.0
    %186 = vmatpush2.msra.mxu0 0.0
    %187 = vmatprep.subr.mxu0 0.0
    %188 = vmatpush2.msra.mxu0 0.0
    %189 = vmatprep.subr.mxu0 0.0
    %190 = vmatpush2.msra.mxu0 0.0
    %191 = vmatprep.subr.mxu0 0.0
    %192 = vmatpush2.msra.mxu0 0.0
    %193 = vmatprep.subr.mxu0 0.0
    %194 = vmatpush2.msra.mxu0 0.0
    %195 = vmatprep.subr.mxu0 0.0
    %196 = vmatpush2.msra.mxu0 0.0
    %197 = vmatprep.mubr.f32.mxu0 0.0
    %198 = vmatmul.mubr.f32.gmra.mxu0 %v127
    %v199 = vpop.f32.mrf.mxu0
    %v200 = vadd.f32 %v123, %v199
    %v201 = vpop.f32.mrf.mxu0
    %202 = vdwg.mxu0
    %v203 = vmax.f32 %v200, 0.0
    %v204 = vld [vmem:[%s5] sm:$0xff]
    %v205 = vld [vmem:[%s5 + $0x8] sm:$0xff]
    %v206 = vld [vmem:[%s5 + $0x10] sm:$0xf]
    %v207 = vld [vmem:[%s6] sm:$0x1]
    %v209 = vlaneseq
    %v210 = vshrl.u32 %v209, 7
    %v211 = vsub.s32 0, %v210
    %v212 = vrot.slane %v207, %v211
    %v215 = vsel %vm125, %v203, 0
    %v218 = vsel %vm129, %v206, 0
    %220 = vmatprep.subr.mxu0 0.0
    %221 = vmatpush1.msra.mxu0 0.0
    %222 = vmatprep.subr.mxu0 0.0
    %223 = vmatpush1.msra.mxu0 0.0
    %224 = vmatprep.subr.mxu0 0.0
    %225 = vmatpush1.msra.mxu0 0.0
    %226 = vmatprep.subr.mxu0 0.0
    %227 = vmatpush1.msra.mxu0 0.0
    %228 = vmatprep.subr.mxu0 0.0
    %229 = vmatpush1.msra.mxu0 0.0
    %230 = vmatprep.subr.mxu0 0.0
    %231 = vmatpush1.msra.mxu0 0.0
    %232 = vmatprep.subr.mxu0 0.0
    %233 = vmatpush1.msra.mxu0 0.0
    %234 = vmatprep.subr.mxu0 0.0
    %235 = vmatpush1.msra.mxu0 0.0
    %236 = vmatprep.subr.mxu0 0.0
    %237 = vmatpush1.msra.mxu0 0.0
    %238 = vmatprep.subr.mxu0 0.0
    %239 = vmatpush1.msra.mxu0 0.0
    %240 = vmatprep.subr.mxu0 0.0
    %241 = vmatpush1.msra.mxu0 0.0
    %242 = vmatprep.subr.mxu0 0.0
    %243 = vmatpush1.msra.mxu0 0.0
    %244 = vmatprep.subr.mxu0 0.0
    %245 = vmatpush1.msra.mxu0 0.0
    %246 = vmatprep.subr.mxu0 0.0
    %247 = vmatpush1.msra.mxu0 %v218
    %248 = vmatprep.subr.mxu0 0.0
    %249 = vmatpush1.msra.mxu0 %v205
    %250 = vmatprep.subr.mxu0 0.0
    %251 = vmatpush1.msra.mxu0 %v204
    %252 = vmatprep.subr.mxu0 0.0
    %253 = vmatpush2.msra.mxu0 0.0
    %254 = vmatprep.subr.mxu0 0.0
    %255 = vmatpush2.msra.mxu0 0.0
    %256 = vmatprep.subr.mxu0 0.0
    %257 = vmatpush2.msra.mxu0 0.0
    %258 = vmatprep.subr.mxu0 0.0
    %259 = vmatpush2.msra.mxu0 0.0
    %260 = vmatprep.subr.mxu0 0.0
    %261 = vmatpush2.msra.mxu0 0.0
    %262 = vmatprep.subr.mxu0 0.0
    %263 = vmatpush2.msra.mxu0 0.0
    %264 = vmatprep.subr.mxu0 0.0
    %265 = vmatpush2.msra.mxu0 0.0
    %266 = vmatprep.subr.mxu0 0.0
    %267 = vmatpush2.msra.mxu0 0.0
    %268 = vmatprep.subr.mxu0 0.0
    %269 = vmatpush2.msra.mxu0 0.0
    %270 = vmatprep.subr.mxu0 0.0
    %271 = vmatpush2.msra.mxu0 0.0
    %272 = vmatprep.subr.mxu0 0.0
    %273 = vmatpush2.msra.mxu0 0.0
    %274 = vmatprep.subr.mxu0 0.0
    %275 = vmatpush2.msra.mxu0 0.0
    %276 = vmatprep.subr.mxu0 0.0
    %277 = vmatpush2.msra.mxu0 0.0
    %278 = vmatprep.subr.mxu0 0.0
    %279 = vmatpush2.msra.mxu0 0.0
    %280 = vmatprep.subr.mxu0 0.0
    %281 = vmatpush2.msra.mxu0 0.0
    %282 = vmatprep.subr.mxu0 0.0
    %283 = vmatpush2.msra.mxu0 0.0
    %284 = vmatprep.mubr.f32.mxu0 0.0
    %285 = vmatmul.mubr.f32.gmra.mxu0 %v215
    %v286 = vpop.f32.mrf.mxu0
    %v287 = vadd.f32 %v212, %v286
    %v288 = vpop.f32.mrf.mxu0
    %289 = vdwg.mxu0
    %290 = vst.msk [vmem:[#allocation2] sm:$0xff] %vm40, %v287
    // Predicated region
    $region30: #{tpu_custom_call.1} parent=1 // pred_check
      _
    $region31: #{tpu_custom_call.1} parent=1 // pred_check_branch
      %292 = sbr.rel (0) target = $region33
    $region32: #{tpu_custom_call.1} parent=1 // pred_region
      %s294 = ssub.s32 128, 128
      %295 = vsyncadd [#allocation3], %s294
      %s297 = sshll.u32 [#allocation2], 4
      %s298 = int_to_ptr.vmem [resolvable:$true] %s297
      %300 = dma.vmem_to_hbm [thread:$0]  %s298, 128, %s7, [#allocation3]
    $region33: #{tpu_custom_call.1} parent=1 // pred_fallthru
      _
    // Predicated region
    $region34: #{tpu_custom_call.1} parent=1 // pred_check
      _
    $region35: #{tpu_custom_call.1} parent=1 // pred_check_branch
      %302 = sbr.rel (0) target = $region37
    $region36: #{tpu_custom_call.1} parent=1 // pred_region
      %303 = dma.done [#allocation3], 128
    $region37: #{tpu_custom_call.1} parent=1 // pred_fallthru
      _
    %304 = vsyncpa [#allocation3], 1

</llo_original>
